<compile_context>
chip_gen: v5e
topology: v5e:2x2
jax: 0.10.0
libtpu: 0.0.40
codegen_flags: <defaults>
</compile_context>

<pallas_src>
import functools

import jax
import jax.numpy as jnp
from jax.experimental import pallas as pl
from jax.experimental.pallas import tpu as pltpu

EPS = 1e-5  # nn.InstanceNorm2d default eps

# Set to True/False to pin pltpu.roll semantics and skip the device probe
# (recommended for production / AOT / interpret-mode flows).
_ROLL_IS_NP_OVERRIDE = None


@functools.cache
def _roll_is_np():
    """True iff pltpu.roll(x, s)[i] == x[(i - s) % N] (np.roll semantics)."""
    if _ROLL_IS_NP_OVERRIDE is not None:
        return bool(_ROLL_IS_NP_OVERRIDE)

    def probe(x_ref, o_ref):
        o_ref[...] = pltpu.roll(x_ref[...], 1, axis=1)

    x = jnp.arange(128, dtype=jnp.float32).reshape(1, 128)
    y = pl.pallas_call(
        probe, out_shape=jax.ShapeDtypeStruct((1, 128), jnp.float32))(x)
    return bool(y[0, 0] == 127.0)


def _choose_bblk(batch, max_bblk=8):
    """Largest divisor of `batch` <= max_bblk that keeps >= 2 grid steps."""
    if batch < 4:
        return 1
    best = 1
    for d in range(2, min(max_bblk, batch // 2) + 1):
        if batch % d == 0:
            best = d
    return best


def _make_residual_block_kernel(H, W, roll_is_np):
    HW = H * W
    w_pow2 = (W & (W - 1)) == 0

    def kernel(x_ref, w1_ref, w2_ref, a_ref, o_ref):
        Bblk, Cp, _ = x_ref.shape
        a = a_ref[0]                          # shared PReLU slope (SMEM scalar)

        # ---- loop-invariant reflection-boundary masks (hoisted) -------------
        pos = jax.lax.broadcasted_iota(jnp.int32, (Cp, HW), 1)
        col = (pos & (W - 1)) if w_pow2 else (pos % W)
        row_lo = pos < W                      # h == 0
        row_hi = pos >= HW - W                # h == H - 1
        col_lo = col == 0                     # w == 0
        col_hi = col == W - 1                 # w == W - 1

        def roll_np(v, s):
            # np.roll(v, s) along lanes: out[q] = v[(q - s) % HW]
            s = s % HW
            return pltpu.roll(v, s if roll_is_np else (HW - s) % HW, axis=1)

        def im2col(v):
            # Nine reflect-padded 3x3 taps stacked on the sublane axis
            # (9*Cp, HW).  Symmetric taps share rolls: 8 rolls per conv total.
            U = roll_np(v, +W)                        # v[q - W]  (row above)
            D = roll_np(v, -W)                        # v[q + W]  (row below)
            v_up = jnp.where(row_lo, D, U)            # kh = 0 (reflect at h=0)
            v_dn = jnp.where(row_hi, U, D)            # kh = 2 (reflect at h=H-1)
            taps = []
            for vv in (v_up, v, v_dn):                # kh = 0, 1, 2
                L = roll_np(vv, +1)                   # vv[q - 1]
                R = roll_np(vv, -1)                   # vv[q + 1]
                taps.append(jnp.where(col_lo, R, L))  # kw = 0 (reflect at w=0)
                taps.append(vv)                       # kw = 1
                taps.append(jnp.where(col_hi, L, R))  # kw = 2 (reflect at w=W-1)
            return jnp.concatenate(taps, axis=0)

        def conv3x3(v, w_ref):
            # Single MXU matmul per conv: (Cp, 9*Cp) @ (9*Cp, HW) -> (Cp, HW).
            # Conv bias omitted: cancelled exactly by the following no-affine
            # InstanceNorm mean subtraction.
            return jnp.dot(w_ref[...], im2col(v),
                           preferred_element_type=jnp.float32)

        def inorm(y):
            # Two-pass InstanceNorm2d (biased variance, eps=1e-5, no affine);
            # reductions run along lanes; output stays (Cp, HW).
            inv_n = 1.0 / HW
            mean = jnp.sum(y, axis=-1, keepdims=True) * inv_n
            c = y - mean
            var = jnp.sum(c * c, axis=-1, keepdims=True) * inv_n
            return c * jax.lax.rsqrt(var + EPS)

        def prelu(y):
            return jnp.where(y >= 0.0, y, a * y)

        def body(i, carry):
            x = x_ref[i].astype(jnp.float32)                    # (Cp, HW)
            h = prelu(inorm(conv3x3(x, w1_ref)))
            out = prelu(inorm(conv3x3(h, w2_ref)) + x)          # residual add
            o_ref[i] = out.astype(o_ref.dtype)
            return carry

        jax.lax.fori_loop(0, Bblk, body, 0, unroll=True)

    return kernel


def _pack_conv_weight(w, Cp):
    """(Cout, Cin, 3, 3) PyTorch weight -> (Cp, 9*Cp) im2col weight
    (tap-major order matching im2col(); zero-padded to the sublane tile)."""
    Cout, Cin = w.shape[0], w.shape[1]
    w_ = jnp.transpose(w, (0, 2, 3, 1))                      # (Cout, kh, kw, Cin)
    w_ = jnp.pad(w_, ((0, Cp - Cout), (0, 0), (0, 0), (0, Cp - Cin)))
    return w_.reshape(Cp, 9 * Cp).astype(jnp.float32)


def residual_block(x_nchw, w1, b1, w2, b2, prelu_a, *, bblk=None):
    """x_nchw: (B, C, H, W); w*: (Cout, Cin, 3, 3); b*: (Cout,); prelu_a: (1,).
    Returns (B, C, H, W).  Requires Cout == Cin (residual add), like the module.
    b1/b2 are accepted for interface parity but have no effect on the output:
    InstanceNorm2d (no affine) removes any per-channel constant exactly."""
    B, C, H, W = x_nchw.shape
    HW = H * W
    Cp = max(8, -(-C // 8) * 8)          # round channels up to the sublane tile
    assert w1.shape[0] == w1.shape[1] == C and w2.shape[0] == w2.shape[1] == C
    del b1, b2                           # mathematically cancelled (see header)

    Bblk = _choose_bblk(B) if bblk is None else bblk
    assert B % Bblk == 0
    grid = B // Bblk

    x2 = x_nchw.reshape(B, C, HW)        # free reshape - no NCHW<->NHWC transpose
    if Cp != C:
        # Pad channels to the sublane tile once in the wrapper (cheap HLO pad)
        # so the kernel reads a full (Cp, HW) block with no scratch copy.
        x2 = jnp.pad(x2, ((0, 0), (0, Cp - C), (0, 0)))
    w1m = _pack_conv_weight(w1, Cp)
    w2m = _pack_conv_weight(w2, Cp)
    a = prelu_a.reshape(1).astype(jnp.float32)

    kernel = _make_residual_block_kernel(H, W, _roll_is_np())

    out = pl.pallas_call(
        kernel,
        out_shape=jax.ShapeDtypeStruct((B, Cp, HW), x_nchw.dtype),
        grid=(grid,),
        in_specs=[
            pl.BlockSpec((Bblk, Cp, HW), lambda b: (b, 0, 0)),   # Bblk samples/step
            pl.BlockSpec((Cp, 9 * Cp), lambda b: (0, 0)),        # conv1 weight
            pl.BlockSpec((Cp, 9 * Cp), lambda b: (0, 0)),        # conv2 weight
            pl.BlockSpec(memory_space=pltpu.MemorySpace.SMEM),   # PReLU slope
        ],
        out_specs=pl.BlockSpec((Bblk, Cp, HW), lambda b: (b, 0, 0)),
        compiler_params=pltpu.CompilerParams(
            dimension_semantics=("parallel",)),
    )(x2, w1m, w2m, a)

    return out[:, :C, :].reshape(B, C, H, W)


def _reference(x, w1, b1, w2, b2, a):
    # pure-JAX reference (NCHW) for correctness checking
    def conv(x, w, b):
        xp = jnp.pad(x, ((0, 0), (0, 0), (1, 1), (1, 1)), mode="reflect")
        y = jax.lax.conv_general_dilated(
            xp, w, (1, 1), "VALID",
            dimension_numbers=("NCHW", "OIHW", "NCHW"))
        return y + b[None, :, None, None]

    def inorm(x):
        m = jnp.mean(x, axis=(2, 3), keepdims=True)
        v = jnp.mean((x - m) ** 2, axis=(2, 3), keepdims=True)
        return (x - m) / jnp.sqrt(v + EPS)

    def prelu(x):
        return jnp.where(x >= 0.0, x, a[0] * x)

    out = prelu(inorm(conv(x, w1, b1)))
    out = inorm(conv(out, w2, b2)) + x
    return prelu(out)


if __name__ == "__main__":
    B, C, H, W = 2, 4, 16, 16              # in_channels == out_channels == 4
    key = jax.random.PRNGKey(0)
    kx, kw1, kb1, kw2, kb2 = jax.random.split(key, 5)

    x = jax.random.normal(kx, (B, C, H, W), jnp.float32)
    # deterministic synthetic parameters (PyTorch shapes: Conv2d(C, C, 3))
    w1 = jax.random.normal(kw1, (C, C, 3, 3), jnp.float32) * 0.1
    b1 = jax.random.normal(kb1, (C,), jnp.float32) * 0.1
    w2 = jax.random.normal(kw2, (C, C, 3, 3), jnp.float32) * 0.1
    b2 = jax.random.normal(kb2, (C,), jnp.float32) * 0.1
    prelu_a = jnp.array([0.25], jnp.float32)   # nn.PReLU() default init

    out = residual_block(x, w1, b1, w2, b2, prelu_a)
    out = jax.block_until_ready(out)

    ref = _reference(x, w1, b1, w2, b2, prelu_a)
    assert out.shape == (B, C, H, W)
    assert jnp.allclose(out, ref, rtol=1e-4, atol=1e-4), "mismatch vs reference"

    print("KERNEL_OK")
</pallas_src>

<mosaic_0001>
module attributes {stable_mosaic.version = 11 : i64} {
  func.func @probe(%arg0: memref<1x128xf32, #tpu.memory_space<vmem>>, %arg1: memref<1x128xf32, #tpu.memory_space<vmem>>) attributes {dimension_semantics = [], scalar_prefetch = 0 : i64, scratch_operands = 0 : i64, tpu.core_type = #tpu.core_type<tc>} {
    %c0 = arith.constant 0 : index
    %c0_0 = arith.constant 0 : index
    %0 = vector.load %arg0[%c0, %c0_0] : memref<1x128xf32, #tpu.memory_space<vmem>>, vector<1x128xf32>
    %c1_i32 = arith.constant 1 : i32
    %1 = tpu.dynamic_rotate %0 by %c1_i32 dim 1 : vector<1x128xf32>, i32 -> vector<1x128xf32>
    %c0_1 = arith.constant 0 : index
    %c0_2 = arith.constant 0 : index
    %2 = vector.load %arg1[%c0_1, %c0_2] : memref<1x128xf32, #tpu.memory_space<vmem>>, vector<1x128xf32>
    tpu.vector_store %arg1[%c0_1, %c0_2], %1 {strides = array<i32>} : memref<1x128xf32, #tpu.memory_space<vmem>>, vector<1x128xf32>,
    return
  }
}

</mosaic_0001>

<llo_original>
// kernel: tpu_custom_call.1
$region0: #{tpu_custom_call.1}
  #allocation0 [shape = 'u32[]', space=smem, size = 0x4, offset = 0x4, fixed_abs, tag = 'smem constant byte address 0x4 - core index']
  #allocation1 [shape = 'u32[72,128]{1,0:T(1,128)}', space=vmem, size = 0x9000, scoped, tag = 'internal scratch']
  %s0 = inlined_call_operand.hbm [shape: f32[1,128], index: 0, kind: input, shape index: {}]
  %s1 = inlined_call_operand.hbm [shape: f32[1,128], index: 1, kind: output, shape index: {}]
  %s2 = sld [smem:[#allocation0]]
  $region18: #{tpu_custom_call.1} parent=0
    _
  %s4 = ssub.s32 1, %s2
  %s5 = scalar_select 0, %s4, %s2
  $region1: #{tpu_custom_call.1} parent=0
    #allocation2 [shape = 'u8[512]{0}', space=vmem, size = 0x400, scoped, tag = 'input window, operand 0, single buffered']
    #allocation3 [shape = 's32[1]{0}', space=sflag, size = 0x4, scoped, tag = 'scoped memory for tpu_custom_call.1']
    #allocation4 [shape = 's32[1]{0}', space=sflag, size = 0x4, scoped, tag = 'scoped memory for tpu_custom_call.1']
    #allocation5 [shape = 'u8[512]{0}', space=vmem, size = 0x400, scoped, tag = 'output window, operand 0, single buffered']
    %6 = vsyncpa [#allocation3], 0
    %7 = vsyncpa [#allocation4], 0
    // Predicated region
    $region2: #{tpu_custom_call.1} parent=1 // pred_check
      _
    $region3: #{tpu_custom_call.1} parent=1 // pred_check_branch
      %9 = sbr.rel (0) target = $region5
    $region4: #{tpu_custom_call.1} parent=1 // pred_region
      %11 = vsyncadd [#allocation3], 0
      %s13 = sshll.u32 %s0, 4
      %s14 = int_to_ptr.hbm [resolvable:$true] %s13
      %s15 = sshll.u32 [#allocation2], 4
      %s16 = int_to_ptr.vmem [resolvable:$true] %s15
      %18 = dma.hbm_to_vmem [thread:$0]  %s14, 16, %s16, [#allocation3]
    $region5: #{tpu_custom_call.1} parent=1 // pred_fallthru
      _
    // Predicated region
    $region6: #{tpu_custom_call.1} parent=1 // pred_check
      _
    $region7: #{tpu_custom_call.1} parent=1 // pred_check_branch
      %20 = sbr.rel (0) target = $region9
    $region8: #{tpu_custom_call.1} parent=1 // pred_region
      %22 = dma.done [#allocation3], 16
    $region9: #{tpu_custom_call.1} parent=1 // pred_fallthru
      _
    %v23 = vld [vmem:[#allocation2] sm:$0x1]
    %24 = vrot.lane.b32.xlu0 %v23, 1
    %v25 = vpop.permute.xlu0 %24
    %26 = vst [vmem:[#allocation5] sm:$0x1] %v25
    // Predicated region
    $region10: #{tpu_custom_call.1} parent=1 // pred_check
      _
    $region11: #{tpu_custom_call.1} parent=1 // pred_check_branch
      %28 = sbr.rel (0) target = $region13
    $region12: #{tpu_custom_call.1} parent=1 // pred_region
      %30 = vsyncadd [#allocation4], 0
      %s32 = sshll.u32 [#allocation5], 4
      %s33 = int_to_ptr.vmem [resolvable:$true] %s32
      %s34 = sshll.u32 %s1, 4
      %s35 = int_to_ptr.hbm [resolvable:$true] %s34
      %37 = dma.vmem_to_hbm [thread:$0]  %s33, 16, %s35, [#allocation4]
    $region13: #{tpu_custom_call.1} parent=1 // pred_fallthru
      _
    // Predicated region
    $region14: #{tpu_custom_call.1} parent=1 // pred_check
      _
    $region15: #{tpu_custom_call.1} parent=1 // pred_check_branch
      %39 = sbr.rel (0) target = $region17
    $region16: #{tpu_custom_call.1} parent=1 // pred_region
      %41 = dma.done [#allocation4], 16
    $region17: #{tpu_custom_call.1} parent=1 // pred_fallthru
      _
    %42 = vsyncpa [#allocation3], 1
    %43 = vsyncpa [#allocation4], 1

</llo_original>
